<compile_context>
chip_gen: v6e
topology: v6e:2x2x1
jax: 0.10.0
libtpu: 0.0.40
codegen_flags: <defaults>
</compile_context>

<pallas_src>
import jax
import jax.numpy as jnp
from jax.experimental import pallas as pl
from jax.experimental.pallas import tpu as pltpu

IN_FEATURES = 100
HIDDEN = 200

PALLAS_MIN_B = 16     # below this, plain XLA fusion beats the custom-call launch
SPLIT_MIN_B = 1024    # above this, use >=2 batch tiles (v7x has 2 TensorCores)


def _round_up(n, m):
    return ((n + m - 1) // m) * m


def _policy_kernel(x_ref, w1_ref, b1_ref, w2_ref, b2_ref, out_ref):
    # (TB, IN) @ (IN, HID) -> (TB, HID) on the MXU with f32 accumulation.
    x = x_ref[...]
    h = jnp.dot(x, w1_ref[...], preferred_element_type=jnp.float32)
    h = jnp.maximum(h + b1_ref[...], 0.0)                    # bias + ReLU (VPU)

    s = jnp.dot(h, w2_ref[...], preferred_element_type=jnp.float32)
    s = s + b2_ref[...]                                      # (TB, P) logits

    P = out_ref.shape[-1]
    if P == 2:
        # Two-way softmax in sigmoid form:
        #   p1 = 1 / (1 + e^{s0 - s1})   (== softmax column 1)
        #   p0 = 1 - p1                  (rows sum to exactly 1)
        # Robust to extreme logits (e^{s0-s1} -> inf gives p1 = 0, p0 = 1) and
        # replaces max + 2 exps + divide with one exp + one exact divide.
        d = s[:, 0:1] - s[:, 1:2]                             # s0 - s1
        p1 = pl.reciprocal(1.0 + jnp.exp(d), approx=False)    # exact: keep 1e-5 tol
        p0 = 1.0 - p1
        col = jax.lax.broadcasted_iota(jnp.int32, s.shape, 1)
        out_ref[...] = jnp.where(col == 0, p0, p1).astype(out_ref.dtype)
    else:
        # General-P fallback: numerically stable softmax along the last axis.
        m = jnp.max(s, axis=1, keepdims=True)
        e = jnp.exp(s - m)
        inv = pl.reciprocal(jnp.sum(e, axis=1, keepdims=True), approx=False)
        out_ref[...] = (e * inv).astype(out_ref.dtype)


def send_packet_policy_forward(x, w1, b1, w2, b2, *, block_b=2048):
    """x: (B, 100) f32; w1: (100, 200); b1: (200,); w2: (200, P); b2: (P,).

    Returns softmax probabilities (B, P) f32
    (== F.softmax(affine2(relu(affine1(x))), dim=1)).
    """
    B, in_f = x.shape
    hid = w1.shape[1]
    P = w2.shape[1]

    # Tiny-batch (select_action) path: launch-bound; plain XLA fusion wins.
    if B < PALLAS_MIN_B:
        return _reference_forward(x, w1, b1, w2, b2)

    b1_2d = b1.reshape(1, hid)
    b2_2d = b2.reshape(1, P)

    # Batch tile selection (no padding anywhere — ragged tail handled by Pallas):
    #   * B < SPLIT_MIN_B : one tile covering the whole batch (tb == B is always a
    #     legal block dim), unless the caller forces a smaller block_b.
    #   * B >= SPLIT_MIN_B: at least two tiles so the "parallel" axis feeds both
    #     v7x TensorCores, each tile as large as possible up to block_b so the
    #     ~0.35 us per-grid-step overhead stays amortized.
    block_b = max(8, _round_up(block_b, 8))
    if B >= SPLIT_MIN_B:
        tb = min(block_b, _round_up(pl.cdiv(B, 2), 8))
    else:
        tb = min(block_b, B)
    grid = (pl.cdiv(B, tb),)

    cost = pl.CostEstimate(
        flops=2 * B * (in_f * hid + hid * P),
        transcendentals=B * (1 if P == 2 else P),
        bytes_accessed=4 * (x.size + w1.size + b1.size + w2.size + b2.size + B * P),
    )

    return pl.pallas_call(
        _policy_kernel,
        out_shape=jax.ShapeDtypeStruct((B, P), jnp.float32),
        grid_spec=pltpu.PrefetchScalarGridSpec(
            num_scalar_prefetch=0,
            grid=grid,
            in_specs=[
                pl.BlockSpec((tb, in_f), lambda i: (i, 0)),   # batch tile of x
                pl.BlockSpec((in_f, hid), lambda i: (0, 0)),  # W1 resident
                pl.BlockSpec((1, hid), lambda i: (0, 0)),     # b1 resident
                pl.BlockSpec((hid, P), lambda i: (0, 0)),     # W2 resident
                pl.BlockSpec((1, P), lambda i: (0, 0)),       # b2 resident
            ],
            out_specs=pl.BlockSpec((tb, P), lambda i: (i, 0)),
        ),
        compiler_params=pltpu.CompilerParams(
            # Batch tiles are independent -> shard grid across TCs (v7x: 2 cores).
            dimension_semantics=("parallel",),
        ),
        cost_estimate=cost,
    )(x, w1, b1_2d, w2, b2_2d)


def _reference_forward(x, w1, b1, w2, b2):
    h = jnp.maximum(x @ w1 + b1, 0.0)
    return jax.nn.softmax(h @ w2 + b2, axis=1)


def _check(name, probs, ref):
    assert probs.shape == ref.shape, f"{name}: shape mismatch"
    assert jnp.allclose(probs, ref, atol=1e-5, rtol=1e-5), f"{name}: mismatch vs reference"
    assert jnp.allclose(jnp.sum(probs, axis=1), 1.0, atol=1e-5), f"{name}: rows must sum to 1"


# TODO(synk): select_action (Categorical sampling, eps-greedy, log-prob bookkeeping)
# is host-side RL glue outside the nn.Module forward pass and is not kernelized.

if __name__ == "__main__":
    key = jax.random.PRNGKey(0)
    k_x1, k_x2, k_x3, k_x4, k_w1, k_b1, k_w2, k_b2 = jax.random.split(key, 8)

    IN, HID, P = IN_FEATURES, HIDDEN, 2   # Linear(100, 200) -> Linear(200, 2)

    w1 = jax.random.uniform(k_w1, (IN, HID), jnp.float32, -0.1, 0.1)
    b1 = jax.random.uniform(k_b1, (HID,), jnp.float32, -0.1, 0.1)
    w2 = jax.random.uniform(k_w2, (HID, P), jnp.float32, -0.07, 0.07)
    b2 = jax.random.uniform(k_b2, (P,), jnp.float32, -0.07, 0.07)

    # 1) Tiny batch (select_action regime): dispatches to plain XLA fusion.
    x_tiny = jax.random.normal(k_x1, (4, IN), dtype=jnp.float32)
    p_tiny = jax.block_until_ready(send_packet_policy_forward(x_tiny, w1, b1, w2, b2))
    _check("tiny-B (XLA fallback)", p_tiny, _reference_forward(x_tiny, w1, b1, w2, b2))

    # 2) Single-tile Pallas path: whole batch in one grid step (tb == B == 100).
    x_mid = jax.random.normal(k_x2, (100, IN), dtype=jnp.float32)
    p_mid = jax.block_until_ready(send_packet_policy_forward(x_mid, w1, b1, w2, b2))
    _check("single-tile", p_mid, _reference_forward(x_mid, w1, b1, w2, b2))

    # 3) Multi-tile ragged path: force a small block so grid=3 with a 77-row tail
    #    (tail rows padded on read, dropped on write — no wrapper pad/slice).
    x_rag = jax.random.normal(k_x3, (333, IN), dtype=jnp.float32)
    p_rag = jax.block_until_ready(send_packet_policy_forward(x_rag, w1, b1, w2, b2, block_b=128))
    _check("ragged multi-tile", p_rag, _reference_forward(x_rag, w1, b1, w2, b2))

    # 4) Large batch with default tiling: splits into >=2 tiles (v7x 2-TC path).
    x_big = jax.random.normal(k_x4, (2500, IN), dtype=jnp.float32)
    p_big = jax.block_until_ready(send_packet_policy_forward(x_big, w1, b1, w2, b2))
    _check("large-B default tiling", p_big, _reference_forward(x_big, w1, b1, w2, b2))

    print("KERNEL_OK")
</pallas_src>

<mosaic_0001>
module attributes {stable_mosaic.version = 11 : i64} {
  func.func @_policy_kernel(%arg0: i32, %arg1: memref<100x100xf32, #tpu.memory_space<vmem>>, %arg2: memref<100x200xf32, #tpu.memory_space<vmem>>, %arg3: memref<1x200xf32, #tpu.memory_space<vmem>>, %arg4: memref<200x2xf32, #tpu.memory_space<vmem>>, %arg5: memref<1x2xf32, #tpu.memory_space<vmem>>, %arg6: memref<100x2xf32, #tpu.memory_space<vmem>>) attributes {dimension_semantics = [#tpu.dimension_semantics<parallel>], iteration_bounds = array<i64: 1>, scalar_prefetch = 0 : i64, scratch_operands = 0 : i64, tpu.core_type = #tpu.core_type<tc>, window_params = [{transform_indices = @transform_0, window_bounds = array<i64: 100, 100>}, {pipeline_mode = #tpu.pipeline_mode<synchronous>, transform_indices = @transform_1, window_bounds = array<i64: 100, 200>}, {pipeline_mode = #tpu.pipeline_mode<synchronous>, transform_indices = @transform_2, window_bounds = array<i64: 1, 200>}, {pipeline_mode = #tpu.pipeline_mode<synchronous>, transform_indices = @transform_3, window_bounds = array<i64: 200, 2>}, {pipeline_mode = #tpu.pipeline_mode<synchronous>, transform_indices = @transform_4, window_bounds = array<i64: 1, 2>}, {transform_indices = @transform_5, window_bounds = array<i64: 100, 2>}]} {
    %c0 = arith.constant 0 : index
    %c0_0 = arith.constant 0 : index
    %0 = vector.load %arg1[%c0, %c0_0] : memref<100x100xf32, #tpu.memory_space<vmem>>, vector<100x100xf32>
    %c0_1 = arith.constant 0 : index
    %c0_2 = arith.constant 0 : index
    %1 = vector.load %arg2[%c0_1, %c0_2] : memref<100x200xf32, #tpu.memory_space<vmem>>, vector<100x200xf32>
    %cst = arith.constant dense<0.000000e+00> : vector<100x200xf32>
    %2 = tpu.matmul %0, %1, %cst {dimension_numbers = #tpu.dot_dimension_numbers<[1], [0], [0], [1], [0, 0, 1, 1], [], []>} : vector<100x100xf32>, vector<100x200xf32>, vector<100x200xf32> -> vector<100x200xf32>
    %c0_3 = arith.constant 0 : index
    %c0_4 = arith.constant 0 : index
    %3 = vector.load %arg3[%c0_3, %c0_4] : memref<1x200xf32, #tpu.memory_space<vmem>>, vector<1x200xf32>
    %4 = vector.broadcast %3 : vector<1x200xf32> to vector<100x200xf32>
    %5 = arith.addf %2, %4 : vector<100x200xf32>
    %cst_5 = arith.constant 0.000000e+00 : f32
    %6 = vector.broadcast %cst_5 : f32 to vector<100x200xf32>
    %7 = arith.maximumf %5, %6 : vector<100x200xf32>
    %c0_6 = arith.constant 0 : index
    %c0_7 = arith.constant 0 : index
    %8 = vector.load %arg4[%c0_6, %c0_7] : memref<200x2xf32, #tpu.memory_space<vmem>>, vector<200x2xf32>
    %cst_8 = arith.constant dense<0.000000e+00> : vector<100x2xf32>
    %9 = tpu.matmul %7, %8, %cst_8 {dimension_numbers = #tpu.dot_dimension_numbers<[1], [0], [0], [1], [0, 0, 1, 1], [], []>} : vector<100x200xf32>, vector<200x2xf32>, vector<100x2xf32> -> vector<100x2xf32>
    %c0_9 = arith.constant 0 : index
    %c0_10 = arith.constant 0 : index
    %10 = vector.load %arg5[%c0_9, %c0_10] : memref<1x2xf32, #tpu.memory_space<vmem>>, vector<1x2xf32>
    %11 = vector.broadcast %10 : vector<1x2xf32> to vector<100x2xf32>
    %12 = arith.addf %9, %11 : vector<100x2xf32>
    %13 = vector.extract_strided_slice %12 {offsets = [0, 0], sizes = [100, 1], strides = [1, 1]} : vector<100x2xf32> to vector<100x1xf32>
    %14 = vector.extract_strided_slice %12 {offsets = [0, 1], sizes = [100, 1], strides = [1, 1]} : vector<100x2xf32> to vector<100x1xf32>
    %15 = arith.subf %13, %14 : vector<100x1xf32>
    %16 = math.exp %15 : vector<100x1xf32>
    %cst_11 = arith.constant 1.000000e+00 : f32
    %17 = vector.broadcast %cst_11 : f32 to vector<100x1xf32>
    %18 = arith.addf %17, %16 : vector<100x1xf32>
    %19 = tpu.reciprocal %18 : vector<100x1xf32> -> vector<100x1xf32>
    %cst_12 = arith.constant 1.000000e+00 : f32
    %20 = vector.broadcast %cst_12 : f32 to vector<100x1xf32>
    %21 = arith.subf %20, %19 : vector<100x1xf32>
    %22 = tpu.iota {dimensions = array<i32: 1>} : vector<100x2xi32>
    %c0_i32 = arith.constant 0 : i32
    %23 = vector.broadcast %c0_i32 : i32 to vector<100x2xi32>
    %24 = arith.cmpi eq, %22, %23 : vector<100x2xi32>
    %25 = vector.shape_cast %21 : vector<100x1xf32> to vector<100x1xf32>
    %26 = vector.broadcast %25 : vector<100x1xf32> to vector<100x2xf32>
    %27 = vector.shape_cast %19 : vector<100x1xf32> to vector<100x1xf32>
    %28 = vector.broadcast %27 : vector<100x1xf32> to vector<100x2xf32>
    %29 = arith.select %24, %26, %28 : vector<100x2xi1>, vector<100x2xf32>
    %c0_13 = arith.constant 0 : index
    %c0_14 = arith.constant 0 : index
    %30 = vector.load %arg6[%c0_13, %c0_14] : memref<100x2xf32, #tpu.memory_space<vmem>>, vector<100x2xf32>
    tpu.vector_store %arg6[%c0_13, %c0_14], %29 {strides = array<i32>} : memref<100x2xf32, #tpu.memory_space<vmem>>, vector<100x2xf32>,
    return
  }
  func.func @transform_0(%arg0: i32) -> (i32, i32) {
    %c0_i32 = arith.constant 0 : i32
    %c0_i32_0 = arith.constant 0 : i32
    return %arg0, %c0_i32 : i32, i32
  }
  func.func @transform_1(%arg0: i32) -> (i32, i32) {
    %c0_i32 = arith.constant 0 : i32
    %c0_i32_0 = arith.constant 0 : i32
    %c0_i32_1 = arith.constant 0 : i32
    return %c0_i32, %c0_i32_0 : i32, i32
  }
  func.func @transform_2(%arg0: i32) -> (i32, i32) {
    %c0_i32 = arith.constant 0 : i32
    %c0_i32_0 = arith.constant 0 : i32
    %c0_i32_1 = arith.constant 0 : i32
    return %c0_i32, %c0_i32_0 : i32, i32
  }
  func.func @transform_3(%arg0: i32) -> (i32, i32) {
    %c0_i32 = arith.constant 0 : i32
    %c0_i32_0 = arith.constant 0 : i32
    %c0_i32_1 = arith.constant 0 : i32
    return %c0_i32, %c0_i32_0 : i32, i32
  }
  func.func @transform_4(%arg0: i32) -> (i32, i32) {
    %c0_i32 = arith.constant 0 : i32
    %c0_i32_0 = arith.constant 0 : i32
    %c0_i32_1 = arith.constant 0 : i32
    return %c0_i32, %c0_i32_0 : i32, i32
  }
  func.func @transform_5(%arg0: i32) -> (i32, i32) {
    %c0_i32 = arith.constant 0 : i32
    %c0_i32_0 = arith.constant 0 : i32
    return %arg0, %c0_i32 : i32, i32
  }
}

</mosaic_0001>

<llo_original>
// kernel: tpu_custom_call.1
$region0: #{tpu_custom_call.1}
  #allocation0 [shape = 'u32[]', space=smem, size = 0x4, offset = 0x4, fixed_abs, tag = 'smem constant byte address 0x4 - core index']
  #allocation1 [shape = 'u32[144,128]{1,0:T(1,128)}', space=vmem, size = 0x12000, scoped, tag = 'internal scratch']
  %s0 = inlined_call_operand.vmem [shape: f32[100,100], index: 0, kind: input, shape index: {}]
  %s1 = inlined_call_operand.vmem [shape: f32[100,200], index: 1, kind: input, shape index: {}]
  %s2 = inlined_call_operand.vmem [shape: f32[1,200], index: 2, kind: input, shape index: {}]
  %s3 = inlined_call_operand.vmem [shape: f32[200,2], index: 3, kind: input, shape index: {}]
  %s4 = inlined_call_operand.vmem [shape: f32[1,2], index: 4, kind: input, shape index: {}]
  %s5 = inlined_call_operand.vmem [shape: f32[100,2], index: 5, kind: output, shape index: {}]
  %s6 = sld [smem:[#allocation0]]
  $region30: #{tpu_custom_call.1} parent=0
    _
  %s8 = ssub.s32 1, %s6
  %s9 = scalar_select 0, %s8, %s6
  // Predicated region
  $region2: #{tpu_custom_call.1} parent=0 // pred_check
    _
  $region3: #{tpu_custom_call.1} parent=0 // pred_check_branch
    %11 = sbr.rel (0) target = $region5
  $region4: #{tpu_custom_call.1} parent=0 // pred_region
    _
  $region5: #{tpu_custom_call.1} parent=0 // pred_fallthru
    _
  // Predicated region
  $region6: #{tpu_custom_call.1} parent=0 // pred_check
    _
  $region7: #{tpu_custom_call.1} parent=0 // pred_check_branch
    %13 = sbr.rel (0) target = $region9
  $region8: #{tpu_custom_call.1} parent=0 // pred_region
    _
  $region9: #{tpu_custom_call.1} parent=0 // pred_fallthru
    _
  // Predicated region
  $region10: #{tpu_custom_call.1} parent=0 // pred_check
    _
  $region11: #{tpu_custom_call.1} parent=0 // pred_check_branch
    %15 = sbr.rel (0) target = $region13
  $region12: #{tpu_custom_call.1} parent=0 // pred_region
    _
  $region13: #{tpu_custom_call.1} parent=0 // pred_fallthru
    _
  // Predicated region
  $region14: #{tpu_custom_call.1} parent=0 // pred_check
    _
  $region15: #{tpu_custom_call.1} parent=0 // pred_check_branch
    %17 = sbr.rel (0) target = $region17
  $region16: #{tpu_custom_call.1} parent=0 // pred_region
    _
  $region17: #{tpu_custom_call.1} parent=0 // pred_fallthru
    _
  // Predicated region
  $region18: #{tpu_custom_call.1} parent=0 // pred_check
    _
  $region19: #{tpu_custom_call.1} parent=0 // pred_check_branch
    %19 = sbr.rel (0) target = $region21
  $region20: #{tpu_custom_call.1} parent=0 // pred_region
    _
  $region21: #{tpu_custom_call.1} parent=0 // pred_fallthru
    _
  %v20 = vld [vmem:[%s0] sm:$0xff]
  %v21 = vld [vmem:[%s0 + $0x8] sm:$0xff]
  %v22 = vld [vmem:[%s0 + $0x10] sm:$0xff]
  %v23 = vld [vmem:[%s0 + $0x18] sm:$0xff]
  %v24 = vld [vmem:[%s0 + $0x20] sm:$0xff]
  %v25 = vld [vmem:[%s0 + $0x28] sm:$0xff]
  %v26 = vld [vmem:[%s0 + $0x30] sm:$0xff]
  %v27 = vld [vmem:[%s0 + $0x38] sm:$0xff]
  %v28 = vld [vmem:[%s0 + $0x40] sm:$0xff]
  %v29 = vld [vmem:[%s0 + $0x48] sm:$0xff]
  %v30 = vld [vmem:[%s0 + $0x50] sm:$0xff]
  %v31 = vld [vmem:[%s0 + $0x58] sm:$0xff]
  %v32 = vld [vmem:[%s0 + $0x60] sm:$0xf]
  %v33 = vld [vmem:[%s1] sm:$0xff]
  %v34 = vld [vmem:[%s1 + $0x8] sm:$0xff]
  %v35 = vld [vmem:[%s1 + $0x10] sm:$0xff]
  %v36 = vld [vmem:[%s1 + $0x18] sm:$0xff]
  %v37 = vld [vmem:[%s1 + $0x20] sm:$0xff]
  %v38 = vld [vmem:[%s1 + $0x28] sm:$0xff]
  %v39 = vld [vmem:[%s1 + $0x30] sm:$0xff]
  %v40 = vld [vmem:[%s1 + $0x38] sm:$0xff]
  %v41 = vld [vmem:[%s1 + $0x40] sm:$0xff]
  %v42 = vld [vmem:[%s1 + $0x48] sm:$0xff]
  %v43 = vld [vmem:[%s1 + $0x50] sm:$0xff]
  %v44 = vld [vmem:[%s1 + $0x58] sm:$0xff]
  %v45 = vld [vmem:[%s1 + $0x60] sm:$0xff]
  %v46 = vld [vmem:[%s1 + $0x68] sm:$0xff]
  %v47 = vld [vmem:[%s1 + $0x70] sm:$0xff]
  %v48 = vld [vmem:[%s1 + $0x78] sm:$0xff]
  %v49 = vld [vmem:[%s1 + $0x80] sm:$0xff]
  %v50 = vld [vmem:[%s1 + $0x88] sm:$0xff]
  %v51 = vld [vmem:[%s1 + $0x90] sm:$0xff]
  %v52 = vld [vmem:[%s1 + $0x98] sm:$0xff]
  %v53 = vld [vmem:[%s1 + $0xa0] sm:$0xff]
  %v54 = vld [vmem:[%s1 + $0xa8] sm:$0xff]
  %v55 = vld [vmem:[%s1 + $0xb0] sm:$0xff]
  %v56 = vld [vmem:[%s1 + $0xb8] sm:$0xff]
  %v57 = vld [vmem:[%s1 + $0xc0] sm:$0xf]
  %v58 = vld [vmem:[%s1 + $0xc8] sm:$0xf]
  %v59 = vld [vmem:[%s2] sm:$0x3]
  %v61 = vlaneseq
  %v62 = vshrl.u32 %v61, 7
  %v63 = vsub.s32 0, %v62
  %v64 = vrot.slane %v59, %v63
  %v65 = vlaneseq
  %v66 = vshrl.u32 %v65, 7
  %v67 = vsub.s32 1, %v66
  %v68 = vrot.slane %v59, %v67
  %vm71 = vcmask 818176
  %v73 = vsel %vm71, %v20, 0
  %v76 = vsel %vm71, %v21, 0
  %v79 = vsel %vm71, %v22, 0
  %v82 = vsel %vm71, %v23, 0
  %v85 = vsel %vm71, %v24, 0
  %v88 = vsel %vm71, %v25, 0
  %v91 = vsel %vm71, %v26, 0
  %v94 = vsel %vm71, %v27, 0
  %v97 = vsel %vm71, %v28, 0
  %v100 = vsel %vm71, %v29, 0
  %v103 = vsel %vm71, %v30, 0
  %v106 = vsel %vm71, %v31, 0
  %v109 = vsel %vm71, %v32, 0
  %vm111 = vcmask 1043456
  %v113 = vsel %vm111, %v57, 0
  %v116 = vsel %vm111, %v58, 0
  %118 = vmatprep.subr.mxu0 0.0
  %119 = vmatpush1.msra.mxu0 0.0
  %120 = vmatprep.subr.mxu0 0.0
  %121 = vmatpush1.msra.mxu0 0.0
  %122 = vmatprep.subr.mxu0 0.0
  %123 = vmatpush1.msra.mxu0 0.0
  %124 = vmatprep.subr.mxu0 %v116
  %125 = vmatpush1.msra.mxu0 %v113
  %126 = vmatprep.subr.mxu0 %v56
  %127 = vmatpush1.msra.mxu0 %v55
  %128 = vmatprep.subr.mxu0 %v54
  %129 = vmatpush1.msra.mxu0 %v53
  %130 = vmatprep.subr.mxu0 %v52
  %131 = vmatpush1.msra.mxu0 %v51
  %132 = vmatprep.subr.mxu0 %v50
  %133 = vmatpush1.msra.mxu0 %v49
  %134 = vmatprep.subr.mxu0 %v48
  %135 = vmatpush1.msra.mxu0 %v47
  %136 = vmatprep.subr.mxu0 %v46
  %137 = vmatpush1.msra.mxu0 %v45
  %138 = vmatprep.subr.mxu0 %v44
  %139 = vmatpush1.msra.mxu0 %v43
  %140 = vmatprep.subr.mxu0 %v42
  %141 = vmatpush1.msra.mxu0 %v41
  %142 = vmatprep.subr.mxu0 %v40
  %143 = vmatpush1.msra.mxu0 %v39
  %144 = vmatprep.subr.mxu0 %v38
  %145 = vmatpush1.msra.mxu0 %v37
  %146 = vmatprep.subr.mxu0 %v36
  %147 = vmatpush1.msra.mxu0 %v35
  %148 = vmatprep.subr.mxu0 %v34
  %149 = vmatpush1.msra.mxu0 %v33
  %150 = vmatprep.subr.mxu0 0.0
  %151 = vmatpush2.msra.mxu0 0.0
  %152 = vmatprep.subr.mxu0 0.0
  %153 = vmatpush2.msra.mxu0 0.0
  %154 = vmatprep.subr.mxu0 0.0
  %155 = vmatpush2.msra.mxu0 0.0
  %156 = vmatprep.subr.mxu0 0.0
  %157 = vmatpush2.msra.mxu0 0.0
  %158 = vmatprep.subr.mxu0 0.0
  %159 = vmatpush2.msra.mxu0 0.0
  %160 = vmatprep.subr.mxu0 0.0
  %161 = vmatpush2.msra.mxu0 0.0
  %162 = vmatprep.subr.mxu0 0.0
  %163 = vmatpush2.msra.mxu0 0.0
  %164 = vmatprep.subr.mxu0 0.0
  %165 = vmatpush2.msra.mxu0 0.0
  %166 = vmatprep.subr.mxu0 0.0
  %167 = vmatpush2.msra.mxu0 0.0
  %168 = vmatprep.subr.mxu0 0.0
  %169 = vmatpush2.msra.mxu0 0.0
  %170 = vmatprep.subr.mxu0 0.0
  %171 = vmatpush2.msra.mxu0 0.0
  %172 = vmatprep.subr.mxu0 0.0
  %173 = vmatpush2.msra.mxu0 0.0
  %174 = vmatprep.subr.mxu0 0.0
  %175 = vmatpush2.msra.mxu0 0.0
  %176 = vmatprep.subr.mxu0 0.0
  %177 = vmatpush2.msra.mxu0 0.0
  %178 = vmatprep.subr.mxu0 0.0
  %179 = vmatpush2.msra.mxu0 0.0
  %180 = vmatprep.subr.mxu0 0.0
  %181 = vmatpush2.msra.mxu0 0.0
  %182 = vmatprep.mubr.f32.mxu0 0.0
  %183 = vmatmul.mubr.f32.gmra.mxu0 %v73
  %v184 = vpop.f32.mrf.mxu0
  %v185 = vadd.f32 %v64, %v184
  %v186 = vpop.f32.mrf.mxu0
  %v187 = vadd.f32 %v68, %v186
  %188 = vmatprep.mubr.f32.mxu0 0.0
  %189 = vmatmul.mubr.f32.gmra.mxu0 %v76
  %v190 = vpop.f32.mrf.mxu0
  %v191 = vadd.f32 %v64, %v190
  %v192 = vpop.f32.mrf.mxu0
  %v193 = vadd.f32 %v68, %v192
  %194 = vmatprep.mubr.f32.mxu0 0.0
  %195 = vmatmul.mubr.f32.gmra.mxu0 %v79
  %v196 = vpop.f32.mrf.mxu0
  %v197 = vadd.f32 %v64, %v196
  %v198 = vpop.f32.mrf.mxu0
  %v199 = vadd.f32 %v68, %v198
  %200 = vmatprep.mubr.f32.mxu0 0.0
  %201 = vmatmul.mubr.f32.gmra.mxu0 %v82
  %v202 = vpop.f32.mrf.mxu0
  %v203 = vadd.f32 %v64, %v202
  %v204 = vpop.f32.mrf.mxu0
  %v205 = vadd.f32 %v68, %v204
  %206 = vmatprep.mubr.f32.mxu0 0.0
  %207 = vmatmul.mubr.f32.gmra.mxu0 %v85
  %v208 = vpop.f32.mrf.mxu0
  %v209 = vadd.f32 %v64, %v208
  %v210 = vpop.f32.mrf.mxu0
  %v211 = vadd.f32 %v68, %v210
  %212 = vmatprep.mubr.f32.mxu0 0.0
  %213 = vmatmul.mubr.f32.gmra.mxu0 %v88
  %v214 = vpop.f32.mrf.mxu0
  %v215 = vadd.f32 %v64, %v214
  %v216 = vpop.f32.mrf.mxu0
  %v217 = vadd.f32 %v68, %v216
  %218 = vmatprep.mubr.f32.mxu0 0.0
  %219 = vmatmul.mubr.f32.gmra.mxu0 %v91
  %v220 = vpop.f32.mrf.mxu0
  %v221 = vadd.f32 %v64, %v220
  %v222 = vpop.f32.mrf.mxu0
  %v223 = vadd.f32 %v68, %v222
  %224 = vmatprep.mubr.f32.mxu0 0.0
  %225 = vmatmul.mubr.f32.gmra.mxu0 %v94
  %v226 = vpop.f32.mrf.mxu0
  %v227 = vadd.f32 %v64, %v226
  %v228 = vpop.f32.mrf.mxu0
  %v229 = vadd.f32 %v68, %v228
  %230 = vmatprep.mubr.f32.mxu0 0.0
  %231 = vmatmul.mubr.f32.gmra.mxu0 %v97
  %v232 = vpop.f32.mrf.mxu0
  %v233 = vadd.f32 %v64, %v232
  %v234 = vpop.f32.mrf.mxu0
  %v235 = vadd.f32 %v68, %v234
  %236 = vmatprep.mubr.f32.mxu0 0.0
  %237 = vmatmul.mubr.f32.gmra.mxu0 %v100
  %v238 = vpop.f32.mrf.mxu0
  %v239 = vadd.f32 %v64, %v238
  %v240 = vpop.f32.mrf.mxu0
  %v241 = vadd.f32 %v68, %v240
  %242 = vmatprep.mubr.f32.mxu0 0.0
  %243 = vmatmul.mubr.f32.gmra.mxu0 %v103
  %v244 = vpop.f32.mrf.mxu0
  %v245 = vadd.f32 %v64, %v244
  %v246 = vpop.f32.mrf.mxu0
  %v247 = vadd.f32 %v68, %v246
  %248 = vmatprep.mubr.f32.mxu0 0.0
  %249 = vmatmul.mubr.f32.gmra.mxu0 %v106
  %v250 = vpop.f32.mrf.mxu0
  %v251 = vadd.f32 %v64, %v250
  %v252 = vpop.f32.mrf.mxu0
  %v253 = vadd.f32 %v68, %v252
  %254 = vmatprep.mubr.f32.mxu0 0.0
  %255 = vmatmul.mubr.f32.gmra.mxu0 %v109
  %v256 = vpop.f32.mrf.mxu0
  %v257 = vadd.f32 %v64, %v256
  %v258 = vpop.f32.mrf.mxu0
  %v259 = vadd.f32 %v68, %v258
  %260 = vdwg.mxu0
  %v261 = vmax.f32 %v185, 0.0
  %v262 = vmax.f32 %v187, 0.0
  %v263 = vmax.f32 %v191, 0.0
  %v264 = vmax.f32 %v193, 0.0
  %v265 = vmax.f32 %v197, 0.0
  %v266 = vmax.f32 %v199, 0.0
  %v267 = vmax.f32 %v203, 0.0
  %v268 = vmax.f32 %v205, 0.0
  %v269 = vmax.f32 %v209, 0.0
  %v270 = vmax.f32 %v211, 0.0
  %v271 = vmax.f32 %v215, 0.0
  %v272 = vmax.f32 %v217, 0.0
  %v273 = vmax.f32 %v221, 0.0
  %v274 = vmax.f32 %v223, 0.0
  %v275 = vmax.f32 %v227, 0.0
  %v276 = vmax.f32 %v229, 0.0
  %v277 = vmax.f32 %v233, 0.0
  %v278 = vmax.f32 %v235, 0.0
  %v279 = vmax.f32 %v239, 0.0
  %v280 = vmax.f32 %v241, 0.0
  %v281 = vmax.f32 %v245, 0.0
  %v282 = vmax.f32 %v247, 0.0
  %v283 = vmax.f32 %v251, 0.0
  %v284 = vmax.f32 %v253, 0.0
  %v285 = vmax.f32 %v257, 0.0
  %v286 = vmax.f32 %v259, 0.0
  %v287 = vld [vmem:[%s3] sm:$0xff]
  %v288 = vld [vmem:[%s3 + $0x8] sm:$0xff]
  %v289 = vld [vmem:[%s3 + $0x10] sm:$0xff]
  %v290 = vld [vmem:[%s3 + $0x18] sm:$0xff]
  %v291 = vld [vmem:[%s3 + $0x20] sm:$0xff]
  %v292 = vld [vmem:[%s3 + $0x28] sm:$0xff]
  %v293 = vld [vmem:[%s3 + $0x30] sm:$0xff]
  %v294 = vld [vmem:[%s3 + $0x38] sm:$0xff]
  %v295 = vld [vmem:[%s3 + $0x40] sm:$0xff]
  %v296 = vld [vmem:[%s3 + $0x48] sm:$0xff]
  %v297 = vld [vmem:[%s3 + $0x50] sm:$0xff]
  %v298 = vld [vmem:[%s3 + $0x58] sm:$0xff]
  %v299 = vld [vmem:[%s3 + $0x60] sm:$0xff]
  %v300 = vld [vmem:[%s3 + $0x68] sm:$0xff]
  %v301 = vld [vmem:[%s3 + $0x70] sm:$0xff]
  %v302 = vld [vmem:[%s3 + $0x78] sm:$0xff]
  %v303 = vld [vmem:[%s3 + $0x80] sm:$0xff]
  %v304 = vld [vmem:[%s3 + $0x88] sm:$0xff]
  %v305 = vld [vmem:[%s3 + $0x90] sm:$0xff]
  %v306 = vld [vmem:[%s3 + $0x98] sm:$0xff]
  %v307 = vld [vmem:[%s3 + $0xa0] sm:$0xff]
  %v308 = vld [vmem:[%s3 + $0xa8] sm:$0xff]
  %v309 = vld [vmem:[%s3 + $0xb0] sm:$0xff]
  %v310 = vld [vmem:[%s3 + $0xb8] sm:$0xff]
  %v311 = vld [vmem:[%s3 + $0xc0] sm:$0xff]
  %v312 = vld [vmem:[%s4] sm:$0x1]
  %v314 = vlaneseq
  %v315 = vshrl.u32 %v314, 7
  %v316 = vsub.s32 0, %v315
  %v317 = vrot.slane %v312, %v316
  %vm319 = vcmask 588800
  %v321 = vsel %vm319, %v262, 0
  %v324 = vsel %vm319, %v264, 0
  %v327 = vsel %vm319, %v266, 0
  %v330 = vsel %vm319, %v268, 0
  %v333 = vsel %vm319, %v270, 0
  %v336 = vsel %vm319, %v272, 0
  %v339 = vsel %vm319, %v274, 0
  %v342 = vsel %vm319, %v276, 0
  %v345 = vsel %vm319, %v278, 0
  %v348 = vsel %vm319, %v280, 0
  %v351 = vsel %vm319, %v282, 0
  %v354 = vsel %vm319, %v284, 0
  %v357 = vsel %vm319, %v286, 0
  %359 = vmatprep.subr.mxu0 0.0
  %360 = vmatpush1.msra.mxu0 %v302
  %361 = vmatprep.subr.mxu0 0.0
  %362 = vmatpush1.msra.mxu0 %v301
  %363 = vmatprep.subr.mxu0 0.0
  %364 = vmatpush1.msra.mxu0 %v300
  %365 = vmatprep.subr.mxu0 0.0
  %366 = vmatpush1.msra.mxu0 %v299
  %367 = vmatprep.subr.mxu0 0.0
  %368 = vmatpush1.msra.mxu0 %v298
  %369 = vmatprep.subr.mxu0 0.0
  %370 = vmatpush1.msra.mxu0 %v297
  %371 = vmatprep.subr.mxu0 0.0
  %372 = vmatpush1.msra.mxu0 %v296
  %373 = vmatprep.subr.mxu0 0.0
  %374 = vmatpush1.msra.mxu0 %v295
  %375 = vmatprep.subr.mxu0 0.0
  %376 = vmatpush1.msra.mxu0 %v294
  %377 = vmatprep.subr.mxu0 0.0
  %378 = vmatpush1.msra.mxu0 %v293
  %379 = vmatprep.subr.mxu0 0.0
  %380 = vmatpush1.msra.mxu0 %v292
  %381 = vmatprep.subr.mxu0 0.0
  %382 = vmatpush1.msra.mxu0 %v291
  %383 = vmatprep.subr.mxu0 0.0
  %384 = vmatpush1.msra.mxu0 %v290
  %385 = vmatprep.subr.mxu0 0.0
  %386 = vmatpush1.msra.mxu0 %v289
  %387 = vmatprep.subr.mxu0 0.0
  %388 = vmatpush1.msra.mxu0 %v288
  %389 = vmatprep.subr.mxu0 0.0
  %390 = vmatpush1.msra.mxu0 %v287
  %391 = vmatprep.subr.mxu0 0.0
  %392 = vmatpush2.msra.mxu0 0.0
  %393 = vmatprep.subr.mxu0 0.0
  %394 = vmatpush2.msra.mxu0 0.0
  %395 = vmatprep.subr.mxu0 0.0
  %396 = vmatpush2.msra.mxu0 0.0
  %397 = vmatprep.subr.mxu0 0.0
  %398 = vmatpush2.msra.mxu0 0.0
  %399 = vmatprep.subr.mxu0 0.0
  %400 = vmatpush2.msra.mxu0 0.0
  %401 = vmatprep.subr.mxu0 0.0
  %402 = vmatpush2.msra.mxu0 0.0
  %403 = vmatprep.subr.mxu0 0.0
  %404 = vmatpush2.msra.mxu0 0.0
  %405 = vmatprep.subr.mxu0 0.0
  %406 = vmatpush2.msra.mxu0 %v311
  %407 = vmatprep.subr.mxu0 0.0
  %408 = vmatpush2.msra.mxu0 %v310
  %409 = vmatprep.subr.mxu0 0.0
  %410 = vmatpush2.msra.mxu0 %v309
  %411 = vmatprep.subr.mxu0 0.0
  %412 = vmatpush2.msra.mxu0 %v308
  %413 = vmatprep.subr.mxu0 0.0
  %414 = vmatpush2.msra.mxu0 %v307
  %415 = vmatprep.subr.mxu0 0.0
  %416 = vmatpush2.msra.mxu0 %v306
  %417 = vmatprep.subr.mxu0 0.0
  %418 = vmatpush2.msra.mxu0 %v305
  %419 = vmatprep.subr.mxu0 0.0
  %420 = vmatpush2.msra.mxu0 %v304
  %421 = vmatprep.subr.mxu0 0.0
  %422 = vmatpush2.msra.mxu0 %v303
  %423 = vmatprep.mubr.f32.mxu0 %v321
  %424 = vmatmul.mubr.f32.gmra.mxu0 %v261
  %v425 = vpop.f32.mrf.mxu0
  %v426 = vadd.f32 %v317, %v425
  %v427 = vpop.f32.mrf.mxu0
  %428 = vmatprep.mubr.f32.mxu0 %v324
  %429 = vmatmul.mubr.f32.gmra.mxu0 %v263
  %v430 = vpop.f32.mrf.mxu0
  %v431 = vadd.f32 %v317, %v430
  %v432 = vpop.f32.mrf.mxu0
  %433 = vmatprep.mubr.f32.mxu0 %v327
  %434 = vmatmul.mubr.f32.gmra.mxu0 %v265
  %v435 = vpop.f32.mrf.mxu0
  %v436 = vadd.f32 %v317, %v435
  %v437 = vpop.f32.mrf.mxu0
  %438 = vmatprep.mubr.f32.mxu0 %v330
  %439 = vmatmul.mubr.f32.gmra.mxu0 %v267
  %v440 = vpop.f32.mrf.mxu0
  %v441 = vadd.f32 %v317, %v440
  %v442 = vpop.f32.mrf.mxu0
  %443 = vmatprep.mubr.f32.mxu0 %v333
  %444 = vmatmul.mubr.f32.gmra.mxu0 %v269
  %v445 = vpop.f32.mrf.mxu0
  %v446 = vadd.f32 %v317, %v445
  %v447 = vpop.f32.mrf.mxu0
  %448 = vmatprep.mubr.f32.mxu0 %v336
  %449 = vmatmul.mubr.f32.gmra.mxu0 %v271
  %v450 = vpop.f32.mrf.mxu0
  %v451 = vadd.f32 %v317, %v450
  %v452 = vpop.f32.mrf.mxu0
  %453 = vmatprep.mubr.f32.mxu0 %v339
  %454 = vmatmul.mubr.f32.gmra.mxu0 %v273
  %v455 = vpop.f32.mrf.mxu0
  %v456 = vadd.f32 %v317, %v455
  %v457 = vpop.f32.mrf.mxu0
  %458 = vmatprep.mubr.f32.mxu0 %v342
  %459 = vmatmul.mubr.f32.gmra.mxu0 %v275
  %v460 = vpop.f32.mrf.mxu0
  %v461 = vadd.f32 %v317, %v460
  %v462 = vpop.f32.mrf.mxu0
  %463 = vmatprep.mubr.f32.mxu0 %v345
  %464 = vmatmul.mubr.f32.gmra.mxu0 %v277
  %v465 = vpop.f32.mrf.mxu0
  %v466 = vadd.f32 %v317, %v465
  %v467 = vpop.f32.mrf.mxu0
  %468 = vmatprep.mubr.f32.mxu0 %v348
  %469 = vmatmul.mubr.f32.gmra.mxu0 %v279
  %v470 = vpop.f32.mrf.mxu0
  %v471 = vadd.f32 %v317, %v470
  %v472 = vpop.f32.mrf.mxu0
  %473 = vmatprep.mubr.f32.mxu0 %v351
  %474 = vmatmul.mubr.f32.gmra.mxu0 %v281
  %v475 = vpop.f32.mrf.mxu0
  %v476 = vadd.f32 %v317, %v475
  %v477 = vpop.f32.mrf.mxu0
  %478 = vmatprep.mubr.f32.mxu0 %v354
  %479 = vmatmul.mubr.f32.gmra.mxu0 %v283
  %v480 = vpop.f32.mrf.mxu0
  %v481 = vadd.f32 %v317, %v480
  %v482 = vpop.f32.mrf.mxu0
  %483 = vmatprep.mubr.f32.mxu0 %v357
  %484 = vmatmul.mubr.f32.gmra.mxu0 %v285
  %v485 = vpop.f32.mrf.mxu0
  %v486 = vadd.f32 %v317, %v485
  %v487 = vpop.f32.mrf.mxu0
  %488 = vdwg.mxu0
  %502 = vrot.lane.b32.xlu0 %v426, 127
  %v503 = vpop.permute.xlu0 %502
  %504 = vrot.lane.b32.xlu0 %v431, 127
  %v505 = vpop.permute.xlu0 %504
  %506 = vrot.lane.b32.xlu0 %v436, 127
  %v507 = vpop.permute.xlu0 %506
  %508 = vrot.lane.b32.xlu0 %v441, 127
  %v509 = vpop.permute.xlu0 %508
  %510 = vrot.lane.b32.xlu0 %v446, 127
  %v511 = vpop.permute.xlu0 %510
  %512 = vrot.lane.b32.xlu0 %v451, 127
  %v513 = vpop.permute.xlu0 %512
  %514 = vrot.lane.b32.xlu0 %v456, 127
  %v515 = vpop.permute.xlu0 %514
  %516 = vrot.lane.b32.xlu0 %v461, 127
  %v517 = vpop.permute.xlu0 %516
  %518 = vrot.lane.b32.xlu0 %v466, 127
  %v519 = vpop.permute.xlu0 %518
  %520 = vrot.lane.b32.xlu0 %v471, 127
  %v521 = vpop.permute.xlu0 %520
  %522 = vrot.lane.b32.xlu0 %v476, 127
  %v523 = vpop.permute.xlu0 %522
  %524 = vrot.lane.b32.xlu0 %v481, 127
  %v525 = vpop.permute.xlu0 %524
  %526 = vrot.lane.b32.xlu0 %v486, 127
  %v527 = vpop.permute.xlu0 %526
  %v541 = vsub.f32 %v426, %v503
  %v542 = vsub.f32 %v431, %v505
  %v543 = vsub.f32 %v436, %v507
  %v544 = vsub.f32 %v441, %v509
  %v545 = vsub.f32 %v446, %v511
  %v546 = vsub.f32 %v451, %v513
  %v547 = vsub.f32 %v456, %v515
  %v548 = vsub.f32 %v461, %v517
  %v549 = vsub.f32 %v466, %v519
  %v550 = vsub.f32 %v471, %v521
  %v551 = vsub.f32 %v476, %v523
  %v552 = vsub.f32 %v481, %v525
  %v553 = vsub.f32 %v486, %v527
  %v554 = vmul.f32 %v541, 1.442695
  %v555 = vpow.pop %v554
  %v556 = vmul.f32 %v542, 1.442695
  %v557 = vpow.pop %v556
  %v558 = vmul.f32 %v543, 1.442695
  %v559 = vpow.pop %v558
  %v560 = vmul.f32 %v544, 1.442695
  %v561 = vpow.pop %v560
  %v562 = vmul.f32 %v545, 1.442695
  %v563 = vpow.pop %v562
  %v564 = vmul.f32 %v546, 1.442695
  %v565 = vpow.pop %v564
  %v566 = vmul.f32 %v547, 1.442695
  %v567 = vpow.pop %v566
  %v568 = vmul.f32 %v548, 1.442695
  %v569 = vpow.pop %v568
  %v570 = vmul.f32 %v549, 1.442695
  %v571 = vpow.pop %v570
  %v572 = vmul.f32 %v550, 1.442695
  %v573 = vpow.pop %v572
  %v574 = vmul.f32 %v551, 1.442695
  %v575 = vpow.pop %v574
  %v576 = vmul.f32 %v552, 1.442695
  %v577 = vpow.pop %v576
  %v578 = vmul.f32 %v553, 1.442695
  %v579 = vpow.pop %v578
  %v580 = vadd.f32 %v555, 1.0
  %v581 = vadd.f32 %v557, 1.0
  %v582 = vadd.f32 %v559, 1.0
  %v583 = vadd.f32 %v561, 1.0
  %v584 = vadd.f32 %v563, 1.0
  %v585 = vadd.f32 %v565, 1.0
  %v586 = vadd.f32 %v567, 1.0
  %v587 = vadd.f32 %v569, 1.0
  %v588 = vadd.f32 %v571, 1.0
  %v589 = vadd.f32 %v573, 1.0
  %v590 = vadd.f32 %v575, 1.0
  %v591 = vadd.f32 %v577, 1.0
  %v592 = vadd.f32 %v579, 1.0
  %v593 = vrcp.pop %v580
  %v594 = vrcp.pop %v581
  %v595 = vrcp.pop %v582
  %v596 = vrcp.pop %v583
  %v597 = vrcp.pop %v584
  %v598 = vrcp.pop %v585
  %v599 = vrcp.pop %v586
  %v600 = vrcp.pop %v587
  %v601 = vrcp.pop %v588
  %v602 = vrcp.pop %v589
  %v603 = vrcp.pop %v590
  %v604 = vrcp.pop %v591
  %v605 = vrcp.pop %v592
  %v606 = vsub.f32 1.0, %v593
  %v607 = vsub.f32 1.0, %v594
  %v608 = vsub.f32 1.0, %v595
  %v609 = vsub.f32 1.0, %v596
  %v610 = vsub.f32 1.0, %v597
  %v611 = vsub.f32 1.0, %v598
  %v612 = vsub.f32 1.0, %v599
  %v613 = vsub.f32 1.0, %v600
  %v614 = vsub.f32 1.0, %v601
  %v615 = vsub.f32 1.0, %v602
  %v616 = vsub.f32 1.0, %v603
  %v617 = vsub.f32 1.0, %v604
  %v618 = vsub.f32 1.0, %v605
  %v619 = vlaneseq
  %v620 = vand.u32 %v619, 127
  %vm621 = vcmp.eq.s32.totalorder %v620, 0
  %623 = vset.pattern.permute.xlu0 0
  %624 = vperm.xlu0 %623, %v606
  %v625 = vpop.permute.xlu0 %624
  %628 = vset.pattern.permute.xlu0 0
  %629 = vperm.xlu0 %628, %v607
  %v630 = vpop.permute.xlu0 %629
  %633 = vset.pattern.permute.xlu0 0
  %634 = vperm.xlu0 %633, %v608
  %v635 = vpop.permute.xlu0 %634
  %638 = vset.pattern.permute.xlu0 0
  %639 = vperm.xlu0 %638, %v609
  %v640 = vpop.permute.xlu0 %639
  %643 = vset.pattern.permute.xlu0 0
  %644 = vperm.xlu0 %643, %v610
  %v645 = vpop.permute.xlu0 %644
  %648 = vset.pattern.permute.xlu0 0
  %649 = vperm.xlu0 %648, %v611
  %v650 = vpop.permute.xlu0 %649
  %653 = vset.pattern.permute.xlu0 0
  %654 = vperm.xlu0 %653, %v612
  %v655 = vpop.permute.xlu0 %654
  %658 = vset.pattern.permute.xlu0 0
  %659 = vperm.xlu0 %658, %v613
  %v660 = vpop.permute.xlu0 %659
  %663 = vset.pattern.permute.xlu0 0
  %664 = vperm.xlu0 %663, %v614
  %v665 = vpop.permute.xlu0 %664
  %668 = vset.pattern.permute.xlu0 0
  %669 = vperm.xlu0 %668, %v615
  %v670 = vpop.permute.xlu0 %669
  %673 = vset.pattern.permute.xlu0 0
  %674 = vperm.xlu0 %673, %v616
  %v675 = vpop.permute.xlu0 %674
  %678 = vset.pattern.permute.xlu0 0
  %679 = vperm.xlu0 %678, %v617
  %v680 = vpop.permute.xlu0 %679
  %683 = vset.pattern.permute.xlu0 0
  %684 = vperm.xlu0 %683, %v618
  %v685 = vpop.permute.xlu0 %684
  %688 = vset.pattern.permute.xlu0 0
  %689 = vperm.xlu0 %688, %v593
  %v690 = vpop.permute.xlu0 %689
  %693 = vset.pattern.permute.xlu0 0
  %694 = vperm.xlu0 %693, %v594
  %v695 = vpop.permute.xlu0 %694
  %698 = vset.pattern.permute.xlu0 0
  %699 = vperm.xlu0 %698, %v595
  %v700 = vpop.permute.xlu0 %699
  %703 = vset.pattern.permute.xlu0 0
  %704 = vperm.xlu0 %703, %v596
  %v705 = vpop.permute.xlu0 %704
  %708 = vset.pattern.permute.xlu0 0
  %709 = vperm.xlu0 %708, %v597
  %v710 = vpop.permute.xlu0 %709
  %713 = vset.pattern.permute.xlu0 0
  %714 = vperm.xlu0 %713, %v598
  %v715 = vpop.permute.xlu0 %714
  %718 = vset.pattern.permute.xlu0 0
  %719 = vperm.xlu0 %718, %v599
  %v720 = vpop.permute.xlu0 %719
  %723 = vset.pattern.permute.xlu0 0
  %724 = vperm.xlu0 %723, %v600
  %v725 = vpop.permute.xlu0 %724
  %728 = vset.pattern.permute.xlu0 0
  %729 = vperm.xlu0 %728, %v601
  %v730 = vpop.permute.xlu0 %729
  %733 = vset.pattern.permute.xlu0 0
  %734 = vperm.xlu0 %733, %v602
  %v735 = vpop.permute.xlu0 %734
  %738 = vset.pattern.permute.xlu0 0
  %739 = vperm.xlu0 %738, %v603
  %v740 = vpop.permute.xlu0 %739
  %743 = vset.pattern.permute.xlu0 0
  %744 = vperm.xlu0 %743, %v604
  %v745 = vpop.permute.xlu0 %744
  %748 = vset.pattern.permute.xlu0 0
  %749 = vperm.xlu0 %748, %v605
  %v750 = vpop.permute.xlu0 %749
  %v752 = vsel %vm621, %v625, %v690
  %v753 = vsel %vm621, %v630, %v695
  %v754 = vsel %vm621, %v635, %v700
  %v755 = vsel %vm621, %v640, %v705
  %v756 = vsel %vm621, %v645, %v710
  %v757 = vsel %vm621, %v650, %v715
  %v758 = vsel %vm621, %v655, %v720
  %v759 = vsel %vm621, %v660, %v725
  %v760 = vsel %vm621, %v665, %v730
  %v761 = vsel %vm621, %v670, %v735
  %v762 = vsel %vm621, %v675, %v740
  %v763 = vsel %vm621, %v680, %v745
  %v764 = vsel %vm621, %v685, %v750
  %vm765 = vcmask 15360
  %766 = vst.msk [vmem:[%s5] sm:$0xff] %vm765, %v752
  %767 = vst.msk [vmem:[%s5 + $0x8] sm:$0xff] %vm765, %v753
  %768 = vst.msk [vmem:[%s5 + $0x10] sm:$0xff] %vm765, %v754
  %769 = vst.msk [vmem:[%s5 + $0x18] sm:$0xff] %vm765, %v755
  %770 = vst.msk [vmem:[%s5 + $0x20] sm:$0xff] %vm765, %v756
  %771 = vst.msk [vmem:[%s5 + $0x28] sm:$0xff] %vm765, %v757
  %772 = vst.msk [vmem:[%s5 + $0x30] sm:$0xff] %vm765, %v758
  %773 = vst.msk [vmem:[%s5 + $0x38] sm:$0xff] %vm765, %v759
  %774 = vst.msk [vmem:[%s5 + $0x40] sm:$0xff] %vm765, %v760
  %775 = vst.msk [vmem:[%s5 + $0x48] sm:$0xff] %vm765, %v761
  %776 = vst.msk [vmem:[%s5 + $0x50] sm:$0xff] %vm765, %v762
  %777 = vst.msk [vmem:[%s5 + $0x58] sm:$0xff] %vm765, %v763
  %vm778 = vcmask 11264
  %779 = vst.msk [vmem:[%s5 + $0x60] sm:$0xf] %vm778, %v764
  // Predicated region
  $region22: #{tpu_custom_call.1} parent=0 // pred_check
    _
  $region23: #{tpu_custom_call.1} parent=0 // pred_check_branch
    %781 = sbr.rel (0) target = $region25
  $region24: #{tpu_custom_call.1} parent=0 // pred_region
    _
  $region25: #{tpu_custom_call.1} parent=0 // pred_fallthru
    _
  // Predicated region
  $region26: #{tpu_custom_call.1} parent=0 // pred_check
    _
  $region27: #{tpu_custom_call.1} parent=0 // pred_check_branch
    %783 = sbr.rel (0) target = $region29
  $region28: #{tpu_custom_call.1} parent=0 // pred_region
    _
  $region29: #{tpu_custom_call.1} parent=0 // pred_fallthru
    _

</llo_original>
